<compile_context>
chip_gen: v6e
topology: v6e:2x2x1
jax: 0.10.0
libtpu: 0.0.40
codegen_flags: <defaults>
</compile_context>

<pallas_src>
import math

import jax
import jax.numpy as jnp
from jax.experimental import pallas as pl
from jax.experimental.pallas import tpu as pltpu

LANE = 128        # vreg lane width  (last-dim alignment for matmul widths)
SUBLANE = 8       # f32 sublane count (second-to-last-dim alignment)
MAX_TB = 2048     # max batch-tile rows; working set stays far below VMEM
NEG_MASK = -1e30  # baked into padded head-bias lanes; exp() underflows to 0


def _round_up(x: int, m: int) -> int:
    return (x + m - 1) // m * m


def _orthogonal(key, fan_in, fan_out, gain):
    # Equivalent of torch.nn.init.orthogonal_ on a [fan_out, fan_in] weight,
    # returned transposed ([fan_in, fan_out]) so the kernel computes x @ W.
    a = jax.random.normal(key, (max(fan_in, fan_out), min(fan_in, fan_out)),
                          jnp.float32)
    q, r = jnp.linalg.qr(a)
    q = q * jnp.sign(jnp.diagonal(r))
    if fan_in < fan_out:
        q = q.T
    return gain * q[:fan_in, :fan_out]


def init_actor_params(key, state_dim, dims, action_dim):
    """Params matching ActorDiscretePPO(dims, state_dim, action_dim).

    Layer 0 keeps the natural (unpadded) contraction dim = state_dim and stays
    f32 (tiny weight, no DMA cost). Deeper layers are 128-padded on both dims
    and stored bf16 for the MXU. The head bias carries -1e30 on padded action
    lanes so the softmax needs no explicit mask.
    """
    layer_dims = [state_dim, *dims, action_dim]
    n_layers = len(layer_dims) - 1
    out_pads = [_round_up(d, LANE) for d in layer_dims[1:]]
    keys = jax.random.split(key, n_layers)

    layers = []
    for li in range(n_layers):
        fan_in, fan_out = layer_dims[li], layer_dims[li + 1]
        pin = state_dim if li == 0 else out_pads[li - 1]
        pout = out_pads[li]
        is_head = (li == n_layers - 1)
        if not is_head:
            # torch.nn.Linear default init: U(-1/sqrt(fan_in), 1/sqrt(fan_in))
            kw, kb = jax.random.split(keys[li])
            bound = 1.0 / math.sqrt(fan_in)
            w = jax.random.uniform(kw, (fan_in, fan_out), jnp.float32,
                                   -bound, bound)
            b = jax.random.uniform(kb, (fan_out,), jnp.float32, -bound, bound)
        else:
            # layer_init_with_orthogonal(std=0.1, bias_const=1e-6) on the head
            w = _orthogonal(keys[li], fan_in, fan_out, 0.1)
            b = jnp.full((fan_out,), 1e-6, jnp.float32)

        w_pad = jnp.zeros((pin, pout), jnp.float32).at[:fan_in, :fan_out].set(w)
        b_fill = NEG_MASK if is_head else 0.0
        b_pad = jnp.full((1, pout), b_fill, jnp.float32).at[0, :fan_out].set(b)
        if li > 0:
            w_pad = w_pad.astype(jnp.bfloat16)
        layers.append((w_pad, b_pad))

    return {
        "layers": layers,
        "avg": jnp.zeros((1, state_dim), jnp.float32),   # state_avg
        "std": jnp.ones((1, state_dim), jnp.float32),    # state_std
        "n_actions": action_dim,
        "state_dim": state_dim,
    }


def _make_kernel(n_layers: int):
    def kernel(*refs):
        state_ref, avg_ref, std_ref = refs[:3]
        wb_refs = refs[3:3 + 2 * n_layers]
        pi_ref = refs[3 + 2 * n_layers]
        n_actions = pi_ref.shape[-1]

        # state_norm: (state - state_avg) / state_std  (f32 elementwise)
        x = (state_ref[...] - avg_ref[...]) / std_ref[...]

        # MLP: Linear (+ReLU on hidden layers). Layer 0 f32 (narrow K = D);
        # deeper layers bf16 operands with f32 accumulation.
        for li in range(n_layers):
            w_ref = wb_refs[2 * li]
            b_ref = wb_refs[2 * li + 1]
            lhs = x if li == 0 else x.astype(jnp.bfloat16)
            x = jnp.dot(lhs, w_ref[...],
                        preferred_element_type=jnp.float32) + b_ref[...]
            if li < n_layers - 1:
                x = jnp.maximum(x, 0.0)

        # Padded head lanes carry a -1e30 bias -> exp underflows to exactly 0,
        # so the softmax normalizes over real actions only (no explicit mask).
        m = jnp.max(x, axis=1, keepdims=True)
        e = jnp.exp(x - m)
        denom = jnp.sum(e, axis=1, keepdims=True)
        probs = e / denom                 # exact divide (feeds PPO loss terms)
        pi_ref[...] = probs[:, :n_actions]

    return kernel


def _batch_tiling(batch: int):
    """Pad batch only to a multiple of 8; pick tile rows adaptively."""
    b8 = _round_up(max(batch, 1), SUBLANE)
    if b8 > MAX_TB:
        n_tiles = pl.cdiv(b8, MAX_TB)
    elif b8 > 256:
        n_tiles = 2      # keep both v7x TensorCores busy (harmless elsewhere)
    else:
        n_tiles = 1
    tb = _round_up(pl.cdiv(b8, n_tiles), SUBLANE)
    return tb, tb * n_tiles, n_tiles


def actor_forward(state, params):
    n_actions = params["n_actions"]
    layers = params["layers"]
    n_layers = len(layers)
    B, D = state.shape
    assert D == params["state_dim"]

    tb, b_pad, n_tiles = _batch_tiling(B)
    state_f32 = state.astype(jnp.float32)
    if b_pad != B:
        state_f32 = jnp.pad(state_f32, ((0, b_pad - B), (0, 0)))

    def resident(arr):  # full array, same block every grid step (DMA'd once)
        nd = arr.ndim
        return pl.BlockSpec(arr.shape, lambda i, _nd=nd: (0,) * _nd)

    flat_wb, wb_specs = [], []
    for (w, b) in layers:
        flat_wb += [w, b]
        wb_specs += [resident(w), resident(b)]

    # Advisory cost estimate so XLA can schedule/overlap the (small) kernel.
    flops = 2 * b_pad * sum(w.shape[0] * w.shape[1] for (w, _) in layers)
    param_bytes = sum(w.size * w.dtype.itemsize + b.size * b.dtype.itemsize
                      for (w, b) in layers)
    a_pad = layers[-1][0].shape[1]
    cost = pl.CostEstimate(
        flops=flops,
        transcendentals=b_pad * a_pad,
        bytes_accessed=(state_f32.size * 4 + b_pad * n_actions * 4
                        + param_bytes + 2 * D * 4),
    )

    pi_pad = pl.pallas_call(
        _make_kernel(n_layers),
        out_shape=jax.ShapeDtypeStruct((b_pad, n_actions), jnp.float32),
        grid=(n_tiles,),
        in_specs=[pl.BlockSpec((tb, D), lambda i: (i, 0)),
                  resident(params["avg"]), resident(params["std"])] + wb_specs,
        out_specs=pl.BlockSpec((tb, n_actions), lambda i: (i, 0)),
        compiler_params=pltpu.CompilerParams(
            dimension_semantics=("parallel",)),
        cost_estimate=cost,
    )(state_f32, params["avg"], params["std"], *flat_wb)

    # Only padded batch rows (<= 7 typically) are trimmed; no lane slicing.
    return pi_pad[:B] if b_pad != B else pi_pad


def _reference_forward(state, params):
    """Pure-JAX mirror of the kernel math (same dtypes / padding)."""
    x = (state.astype(jnp.float32) - params["avg"]) / params["std"]
    n_layers = len(params["layers"])
    for li, (w, b) in enumerate(params["layers"]):
        lhs = x if li == 0 else x.astype(jnp.bfloat16)
        x = jnp.dot(lhs, w, preferred_element_type=jnp.float32) + b
        if li < n_layers - 1:
            x = jnp.maximum(x, 0.0)
    p = jax.nn.softmax(x, axis=-1)
    return p[:, :params["n_actions"]]


# TODO(synk): get_action / get_logprob_entropy (Categorical sampling via
# Gumbel-max with pltpu.prng_random_bits, log_prob, entropy) are not fused —
# only forward() (probabilities) is kernelized.


if __name__ == "__main__":
    # Small shapes consistent with ActorDiscretePPO(dims=[32, 32], state_dim=8,
    # action_dim=4) and a batch of 2 states.
    batch = 2
    state_dim = 8
    dims = [32, 32]
    action_dim = 4

    key = jax.random.PRNGKey(0)
    k_params, k_state = jax.random.split(key)

    params = init_actor_params(k_params, state_dim, dims, action_dim)
    state = jax.random.normal(k_state, (batch, state_dim), jnp.float32)

    pi = jax.block_until_ready(actor_forward(state, params))
    ref = jax.block_until_ready(_reference_forward(state, params))

    # Sanity: valid probability rows, matching the pure-JAX reference.
    assert pi.shape == (batch, action_dim)
    assert bool(jnp.all(pi >= 0.0))
    assert bool(jnp.allclose(jnp.sum(pi, axis=-1), 1.0, atol=1e-5))
    assert bool(jnp.allclose(pi, ref, atol=1e-4))

    print("KERNEL_OK")
</pallas_src>

<mosaic_0001>
module attributes {stable_mosaic.version = 11 : i64} {
  func.func @kernel(%arg0: i32, %arg1: memref<8x8xf32, #tpu.memory_space<vmem>>, %arg2: memref<1x8xf32, #tpu.memory_space<vmem>>, %arg3: memref<1x8xf32, #tpu.memory_space<vmem>>, %arg4: memref<8x128xf32, #tpu.memory_space<vmem>>, %arg5: memref<1x128xf32, #tpu.memory_space<vmem>>, %arg6: memref<128x128xbf16, #tpu.memory_space<vmem>>, %arg7: memref<1x128xf32, #tpu.memory_space<vmem>>, %arg8: memref<128x128xbf16, #tpu.memory_space<vmem>>, %arg9: memref<1x128xf32, #tpu.memory_space<vmem>>, %arg10: memref<8x4xf32, #tpu.memory_space<vmem>>) attributes {dimension_semantics = [#tpu.dimension_semantics<parallel>], iteration_bounds = array<i64: 1>, scalar_prefetch = 0 : i64, scratch_operands = 0 : i64, tpu.core_type = #tpu.core_type<tc>, window_params = [{transform_indices = @transform_0, window_bounds = array<i64: 8, 8>}, {pipeline_mode = #tpu.pipeline_mode<synchronous>, transform_indices = @transform_1, window_bounds = array<i64: 1, 8>}, {pipeline_mode = #tpu.pipeline_mode<synchronous>, transform_indices = @transform_2, window_bounds = array<i64: 1, 8>}, {pipeline_mode = #tpu.pipeline_mode<synchronous>, transform_indices = @transform_3, window_bounds = array<i64: 8, 128>}, {pipeline_mode = #tpu.pipeline_mode<synchronous>, transform_indices = @transform_4, window_bounds = array<i64: 1, 128>}, {pipeline_mode = #tpu.pipeline_mode<synchronous>, transform_indices = @transform_5, window_bounds = array<i64: 128, 128>}, {pipeline_mode = #tpu.pipeline_mode<synchronous>, transform_indices = @transform_6, window_bounds = array<i64: 1, 128>}, {pipeline_mode = #tpu.pipeline_mode<synchronous>, transform_indices = @transform_7, window_bounds = array<i64: 128, 128>}, {pipeline_mode = #tpu.pipeline_mode<synchronous>, transform_indices = @transform_8, window_bounds = array<i64: 1, 128>}, {transform_indices = @transform_9, window_bounds = array<i64: 8, 4>}]} {
    %c0 = arith.constant 0 : index
    %c0_0 = arith.constant 0 : index
    %0 = vector.load %arg1[%c0, %c0_0] : memref<8x8xf32, #tpu.memory_space<vmem>>, vector<8x8xf32>
    %c0_1 = arith.constant 0 : index
    %c0_2 = arith.constant 0 : index
    %1 = vector.load %arg2[%c0_1, %c0_2] : memref<1x8xf32, #tpu.memory_space<vmem>>, vector<1x8xf32>
    %2 = vector.broadcast %1 : vector<1x8xf32> to vector<8x8xf32>
    %3 = arith.subf %0, %2 : vector<8x8xf32>
    %c0_3 = arith.constant 0 : index
    %c0_4 = arith.constant 0 : index
    %4 = vector.load %arg3[%c0_3, %c0_4] : memref<1x8xf32, #tpu.memory_space<vmem>>, vector<1x8xf32>
    %5 = vector.broadcast %4 : vector<1x8xf32> to vector<8x8xf32>
    %6 = arith.divf %3, %5 : vector<8x8xf32>
    %c0_5 = arith.constant 0 : index
    %c0_6 = arith.constant 0 : index
    %7 = vector.load %arg4[%c0_5, %c0_6] : memref<8x128xf32, #tpu.memory_space<vmem>>, vector<8x128xf32>
    %cst = arith.constant dense<0.000000e+00> : vector<8x128xf32>
    %8 = tpu.matmul %6, %7, %cst {dimension_numbers = #tpu.dot_dimension_numbers<[1], [0], [0], [1], [0, 0, 1, 1], [], []>} : vector<8x8xf32>, vector<8x128xf32>, vector<8x128xf32> -> vector<8x128xf32>
    %c0_7 = arith.constant 0 : index
    %c0_8 = arith.constant 0 : index
    %9 = vector.load %arg5[%c0_7, %c0_8] : memref<1x128xf32, #tpu.memory_space<vmem>>, vector<1x128xf32>
    %10 = vector.broadcast %9 : vector<1x128xf32> to vector<8x128xf32>
    %11 = arith.addf %8, %10 : vector<8x128xf32>
    %cst_9 = arith.constant 0.000000e+00 : f32
    %12 = vector.broadcast %cst_9 : f32 to vector<8x128xf32>
    %13 = arith.maximumf %11, %12 : vector<8x128xf32>
    %14 = arith.truncf %13 : vector<8x128xf32> to vector<8x128xbf16>
    %c0_10 = arith.constant 0 : index
    %c0_11 = arith.constant 0 : index
    %15 = vector.load %arg6[%c0_10, %c0_11] : memref<128x128xbf16, #tpu.memory_space<vmem>>, vector<128x128xbf16>
    %cst_12 = arith.constant dense<0.000000e+00> : vector<8x128xf32>
    %16 = tpu.matmul %14, %15, %cst_12 {dimension_numbers = #tpu.dot_dimension_numbers<[1], [0], [0], [1], [0, 0, 1, 1], [], []>} : vector<8x128xbf16>, vector<128x128xbf16>, vector<8x128xf32> -> vector<8x128xf32>
    %c0_13 = arith.constant 0 : index
    %c0_14 = arith.constant 0 : index
    %17 = vector.load %arg7[%c0_13, %c0_14] : memref<1x128xf32, #tpu.memory_space<vmem>>, vector<1x128xf32>
    %18 = vector.broadcast %17 : vector<1x128xf32> to vector<8x128xf32>
    %19 = arith.addf %16, %18 : vector<8x128xf32>
    %cst_15 = arith.constant 0.000000e+00 : f32
    %20 = vector.broadcast %cst_15 : f32 to vector<8x128xf32>
    %21 = arith.maximumf %19, %20 : vector<8x128xf32>
    %22 = arith.truncf %21 : vector<8x128xf32> to vector<8x128xbf16>
    %c0_16 = arith.constant 0 : index
    %c0_17 = arith.constant 0 : index
    %23 = vector.load %arg8[%c0_16, %c0_17] : memref<128x128xbf16, #tpu.memory_space<vmem>>, vector<128x128xbf16>
    %cst_18 = arith.constant dense<0.000000e+00> : vector<8x128xf32>
    %24 = tpu.matmul %22, %23, %cst_18 {dimension_numbers = #tpu.dot_dimension_numbers<[1], [0], [0], [1], [0, 0, 1, 1], [], []>} : vector<8x128xbf16>, vector<128x128xbf16>, vector<8x128xf32> -> vector<8x128xf32>
    %c0_19 = arith.constant 0 : index
    %c0_20 = arith.constant 0 : index
    %25 = vector.load %arg9[%c0_19, %c0_20] : memref<1x128xf32, #tpu.memory_space<vmem>>, vector<1x128xf32>
    %26 = vector.broadcast %25 : vector<1x128xf32> to vector<8x128xf32>
    %27 = arith.addf %24, %26 : vector<8x128xf32>
    %cst_21 = arith.constant dense<0xFF800000> : vector<8xf32>
    %28 = vector.multi_reduction <maximumf>, %27, %cst_21 [1] : vector<8x128xf32> to vector<8xf32>
    %29 = vector.shape_cast %28 : vector<8xf32> to vector<8x1xf32>
    %30 = vector.broadcast %29 : vector<8x1xf32> to vector<8x128xf32>
    %31 = arith.subf %27, %30 : vector<8x128xf32>
    %32 = math.exp %31 : vector<8x128xf32>
    %cst_22 = arith.constant dense<0.000000e+00> : vector<8xf32>
    %33 = vector.multi_reduction <add>, %32, %cst_22 [1] : vector<8x128xf32> to vector<8xf32>
    %34 = vector.shape_cast %33 : vector<8xf32> to vector<8x1xf32>
    %35 = vector.broadcast %34 : vector<8x1xf32> to vector<8x128xf32>
    %36 = arith.divf %32, %35 : vector<8x128xf32>
    %37 = vector.extract_strided_slice %36 {offsets = [0, 0], sizes = [8, 4], strides = [1, 1]} : vector<8x128xf32> to vector<8x4xf32>
    %c0_23 = arith.constant 0 : index
    %c0_24 = arith.constant 0 : index
    %38 = vector.load %arg10[%c0_23, %c0_24] : memref<8x4xf32, #tpu.memory_space<vmem>>, vector<8x4xf32>
    tpu.vector_store %arg10[%c0_23, %c0_24], %37 {strides = array<i32>} : memref<8x4xf32, #tpu.memory_space<vmem>>, vector<8x4xf32>,
    return
  }
  func.func @transform_0(%arg0: i32) -> (i32, i32) {
    %c0_i32 = arith.constant 0 : i32
    %c0_i32_0 = arith.constant 0 : i32
    return %arg0, %c0_i32 : i32, i32
  }
  func.func @transform_1(%arg0: i32) -> (i32, i32) {
    %c0_i32 = arith.constant 0 : i32
    %c0_i32_0 = arith.constant 0 : i32
    %c0_i32_1 = arith.constant 0 : i32
    return %c0_i32, %c0_i32_0 : i32, i32
  }
  func.func @transform_2(%arg0: i32) -> (i32, i32) {
    %c0_i32 = arith.constant 0 : i32
    %c0_i32_0 = arith.constant 0 : i32
    %c0_i32_1 = arith.constant 0 : i32
    return %c0_i32, %c0_i32_0 : i32, i32
  }
  func.func @transform_3(%arg0: i32) -> (i32, i32) {
    %c0_i32 = arith.constant 0 : i32
    %c0_i32_0 = arith.constant 0 : i32
    %c0_i32_1 = arith.constant 0 : i32
    return %c0_i32, %c0_i32_0 : i32, i32
  }
  func.func @transform_4(%arg0: i32) -> (i32, i32) {
    %c0_i32 = arith.constant 0 : i32
    %c0_i32_0 = arith.constant 0 : i32
    %c0_i32_1 = arith.constant 0 : i32
    return %c0_i32, %c0_i32_0 : i32, i32
  }
  func.func @transform_5(%arg0: i32) -> (i32, i32) {
    %c0_i32 = arith.constant 0 : i32
    %c0_i32_0 = arith.constant 0 : i32
    %c0_i32_1 = arith.constant 0 : i32
    return %c0_i32, %c0_i32_0 : i32, i32
  }
  func.func @transform_6(%arg0: i32) -> (i32, i32) {
    %c0_i32 = arith.constant 0 : i32
    %c0_i32_0 = arith.constant 0 : i32
    %c0_i32_1 = arith.constant 0 : i32
    return %c0_i32, %c0_i32_0 : i32, i32
  }
  func.func @transform_7(%arg0: i32) -> (i32, i32) {
    %c0_i32 = arith.constant 0 : i32
    %c0_i32_0 = arith.constant 0 : i32
    %c0_i32_1 = arith.constant 0 : i32
    return %c0_i32, %c0_i32_0 : i32, i32
  }
  func.func @transform_8(%arg0: i32) -> (i32, i32) {
    %c0_i32 = arith.constant 0 : i32
    %c0_i32_0 = arith.constant 0 : i32
    %c0_i32_1 = arith.constant 0 : i32
    return %c0_i32, %c0_i32_0 : i32, i32
  }
  func.func @transform_9(%arg0: i32) -> (i32, i32) {
    %c0_i32 = arith.constant 0 : i32
    %c0_i32_0 = arith.constant 0 : i32
    return %arg0, %c0_i32 : i32, i32
  }
}

</mosaic_0001>

<llo_original>
// kernel: tpu_custom_call.1
$region0: #{tpu_custom_call.1}
  #allocation0 [shape = 'u32[]', space=smem, size = 0x4, offset = 0x4, fixed_abs, tag = 'smem constant byte address 0x4 - core index']
  #allocation1 [shape = 'u32[144,128]{1,0:T(1,128)}', space=vmem, size = 0x12000, scoped, tag = 'internal scratch']
  %s0 = inlined_call_operand.hbm [shape: f32[8,8], index: 0, kind: input, shape index: {}]
  %s1 = inlined_call_operand.vmem [shape: f32[1,8], index: 1, kind: input, shape index: {}]
  %s2 = inlined_call_operand.vmem [shape: f32[1,8], index: 2, kind: input, shape index: {}]
  %s3 = inlined_call_operand.hbm [shape: f32[8,128], index: 3, kind: input, shape index: {}]
  %s4 = inlined_call_operand.vmem [shape: f32[1,128], index: 4, kind: input, shape index: {}]
  %s5 = inlined_call_operand.hbm [shape: bf16[128,128], index: 5, kind: input, shape index: {}]
  %s6 = inlined_call_operand.vmem [shape: f32[1,128], index: 6, kind: input, shape index: {}]
  %s7 = inlined_call_operand.hbm [shape: bf16[128,128], index: 7, kind: input, shape index: {}]
  %s8 = inlined_call_operand.vmem [shape: f32[1,128], index: 8, kind: input, shape index: {}]
  %s9 = inlined_call_operand.vmem [shape: f32[8,4], index: 9, kind: output, shape index: {}]
  %s10 = sld [smem:[#allocation0]]
  $region62: #{tpu_custom_call.1} parent=0
    _
  %s12 = ssub.s32 1, %s10
  %s13 = scalar_select 0, %s12, %s10
  $region1: #{tpu_custom_call.1} parent=0
    #allocation2 [shape = 'u8[4096]{0}', space=vmem, size = 0x1000, scoped, tag = 'input window, operand 0, single buffered']
    #allocation3 [shape = 's32[1]{0}', space=sflag, size = 0x4, scoped, tag = 'scoped memory for tpu_custom_call.1']
    #allocation4 [shape = 'u8[4096]{0}', space=vmem, size = 0x1000, scoped, tag = 'input window, operand 3, single buffered']
    #allocation5 [shape = 's32[1]{0}', space=sflag, size = 0x4, scoped, tag = 'scoped memory for tpu_custom_call.1']
    #allocation6 [shape = 'u8[32768]{0}', space=vmem, size = 0x8000, scoped, tag = 'input window, operand 5, single buffered']
    #allocation7 [shape = 'u8[32768]{0}', space=vmem, size = 0x8000, scoped, tag = 'input window, operand 7, single buffered']
    #allocation8 [shape = 's32[1]{0}', space=sflag, size = 0x4, scoped, tag = 'scoped memory for tpu_custom_call.1']
    %14 = vsyncpa [#allocation3], 0
    %15 = vsyncpa [#allocation5], 0
    %16 = vsyncpa [#allocation8], 0
    // Predicated region
    $region2: #{tpu_custom_call.1} parent=1 // pred_check
      _
    $region3: #{tpu_custom_call.1} parent=1 // pred_check_branch
      %18 = sbr.rel (0) target = $region5
    $region4: #{tpu_custom_call.1} parent=1 // pred_region
      %s20 = ssub.s32 128, 128
      %21 = vsyncadd [#allocation3], %s20
      %s23 = sshll.u32 [#allocation2], 4
      %s24 = int_to_ptr.vmem [resolvable:$true] %s23
      %26 = dma.hbm_to_vmem [thread:$0]  %s0, 128, %s24, [#allocation3]
    $region5: #{tpu_custom_call.1} parent=1 // pred_fallthru
      _
    // Predicated region
    $region6: #{tpu_custom_call.1} parent=1 // pred_check
      _
    $region7: #{tpu_custom_call.1} parent=1 // pred_check_branch
      %28 = sbr.rel (0) target = $region9
    $region8: #{tpu_custom_call.1} parent=1 // pred_region
      _
    $region9: #{tpu_custom_call.1} parent=1 // pred_fallthru
      _
    // Predicated region
    $region10: #{tpu_custom_call.1} parent=1 // pred_check
      _
    $region11: #{tpu_custom_call.1} parent=1 // pred_check_branch
      %30 = sbr.rel (0) target = $region13
    $region12: #{tpu_custom_call.1} parent=1 // pred_region
      _
    $region13: #{tpu_custom_call.1} parent=1 // pred_fallthru
      _
    // Predicated region
    $region14: #{tpu_custom_call.1} parent=1 // pred_check
      _
    $region15: #{tpu_custom_call.1} parent=1 // pred_check_branch
      %32 = sbr.rel (0) target = $region17
    $region16: #{tpu_custom_call.1} parent=1 // pred_region
      %s34 = ssub.s32 128, 128
      %35 = vsyncadd [#allocation5], %s34
      %s37 = sshll.u32 [#allocation4], 4
      %s38 = int_to_ptr.vmem [resolvable:$true] %s37
      %40 = dma.hbm_to_vmem [thread:$0]  %s3, 128, %s38, [#allocation5]
    $region17: #{tpu_custom_call.1} parent=1 // pred_fallthru
      _
    // Predicated region
    $region18: #{tpu_custom_call.1} parent=1 // pred_check
      _
    $region19: #{tpu_custom_call.1} parent=1 // pred_check_branch
      %42 = sbr.rel (0) target = $region21
    $region20: #{tpu_custom_call.1} parent=1 // pred_region
      _
    $region21: #{tpu_custom_call.1} parent=1 // pred_fallthru
      _
    // Predicated region
    $region22: #{tpu_custom_call.1} parent=1 // pred_check
      _
    $region23: #{tpu_custom_call.1} parent=1 // pred_check_branch
      %44 = sbr.rel (0) target = $region25
    $region24: #{tpu_custom_call.1} parent=1 // pred_region
      %s46 = ssub.s32 1024, 1024
      %47 = vsyncadd [#allocation5], %s46
      %s48 = sshll.u32 [#allocation6], 4
      %s49 = int_to_ptr.vmem [resolvable:$true] %s48
      %54 = dma.hbm_to_vmem [thread:$0]  %s5, 1024, %s49, [#allocation5], 64, 64, 4
    $region25: #{tpu_custom_call.1} parent=1 // pred_fallthru
      _
    // Predicated region
    $region26: #{tpu_custom_call.1} parent=1 // pred_check
      _
    $region27: #{tpu_custom_call.1} parent=1 // pred_check_branch
      %56 = sbr.rel (0) target = $region29
    $region28: #{tpu_custom_call.1} parent=1 // pred_region
      _
    $region29: #{tpu_custom_call.1} parent=1 // pred_fallthru
      _
    // Predicated region
    $region30: #{tpu_custom_call.1} parent=1 // pred_check
      _
    $region31: #{tpu_custom_call.1} parent=1 // pred_check_branch
      %58 = sbr.rel (0) target = $region33
    $region32: #{tpu_custom_call.1} parent=1 // pred_region
      %s60 = ssub.s32 1024, 1024
      %61 = vsyncadd [#allocation8], %s60
      %s62 = sshll.u32 [#allocation7], 4
      %s63 = int_to_ptr.vmem [resolvable:$true] %s62
      %68 = dma.hbm_to_vmem [thread:$0]  %s7, 1024, %s63, [#allocation8], 64, 64, 4
    $region33: #{tpu_custom_call.1} parent=1 // pred_fallthru
      _
    // Predicated region
    $region34: #{tpu_custom_call.1} parent=1 // pred_check
      _
    $region35: #{tpu_custom_call.1} parent=1 // pred_check_branch
      %70 = sbr.rel (0) target = $region37
    $region36: #{tpu_custom_call.1} parent=1 // pred_region
      _
    $region37: #{tpu_custom_call.1} parent=1 // pred_fallthru
      _
    // Predicated region
    $region38: #{tpu_custom_call.1} parent=1 // pred_check
      _
    $region39: #{tpu_custom_call.1} parent=1 // pred_check_branch
      %72 = sbr.rel (0) target = $region41
    $region40: #{tpu_custom_call.1} parent=1 // pred_region
      %73 = dma.done [#allocation3], 128
    $region41: #{tpu_custom_call.1} parent=1 // pred_fallthru
      _
    // Predicated region
    $region42: #{tpu_custom_call.1} parent=1 // pred_check
      _
    $region43: #{tpu_custom_call.1} parent=1 // pred_check_branch
      %75 = sbr.rel (0) target = $region45
    $region44: #{tpu_custom_call.1} parent=1 // pred_region
      %76 = dma.done [#allocation5], 128
    $region45: #{tpu_custom_call.1} parent=1 // pred_fallthru
      _
    // Predicated region
    $region46: #{tpu_custom_call.1} parent=1 // pred_check
      _
    $region47: #{tpu_custom_call.1} parent=1 // pred_check_branch
      %78 = sbr.rel (0) target = $region49
    $region48: #{tpu_custom_call.1} parent=1 // pred_region
      %79 = dma.done [#allocation5], 1024
    $region49: #{tpu_custom_call.1} parent=1 // pred_fallthru
      _
    // Predicated region
    $region50: #{tpu_custom_call.1} parent=1 // pred_check
      _
    $region51: #{tpu_custom_call.1} parent=1 // pred_check_branch
      %81 = sbr.rel (0) target = $region53
    $region52: #{tpu_custom_call.1} parent=1 // pred_region
      %82 = dma.done [#allocation8], 1024
    $region53: #{tpu_custom_call.1} parent=1 // pred_fallthru
      _
    %v84 = vld [vmem:[#allocation2] sm:$0xff]
    %v85 = vld [vmem:[%s1] sm:$0x1]
    %v87 = vlaneseq
    %v88 = vshrl.u32 %v87, 7
    %v89 = vsub.s32 0, %v88
    %v90 = vrot.slane %v85, %v89
    %v92 = vsub.f32 %v84, %v90
    %v93 = vld [vmem:[%s2] sm:$0x1]
    %v95 = vlaneseq
    %v96 = vshrl.u32 %v95, 7
    %v97 = vsub.s32 0, %v96
    %v98 = vrot.slane %v93, %v97
    %v100 = vrcp.pop %v98
    %v101 = vmul.f32 %v92, %v100
    %v102 = vld [vmem:[#allocation4] sm:$0xff]
    %v103 = vld [vmem:[%s4] sm:$0x1]
    %v105 = vlaneseq
    %v106 = vshrl.u32 %v105, 7
    %v107 = vsub.s32 0, %v106
    %v108 = vrot.slane %v103, %v107
    %vm110 = vcmask 64512
    %v112 = vsel %vm110, %v101, 0
    %114 = vmatprep.subr.mxu0 0.0
    %115 = vmatpush1.msra.mxu0 0.0
    %116 = vmatprep.subr.mxu0 0.0
    %117 = vmatpush1.msra.mxu0 0.0
    %118 = vmatprep.subr.mxu0 0.0
    %119 = vmatpush1.msra.mxu0 0.0
    %120 = vmatprep.subr.mxu0 0.0
    %121 = vmatpush1.msra.mxu0 0.0
    %122 = vmatprep.subr.mxu0 0.0
    %123 = vmatpush1.msra.mxu0 0.0
    %124 = vmatprep.subr.mxu0 0.0
    %125 = vmatpush1.msra.mxu0 0.0
    %126 = vmatprep.subr.mxu0 0.0
    %127 = vmatpush1.msra.mxu0 0.0
    %128 = vmatprep.subr.mxu0 0.0
    %129 = vmatpush1.msra.mxu0 0.0
    %130 = vmatprep.subr.mxu0 0.0
    %131 = vmatpush1.msra.mxu0 0.0
    %132 = vmatprep.subr.mxu0 0.0
    %133 = vmatpush1.msra.mxu0 0.0
    %134 = vmatprep.subr.mxu0 0.0
    %135 = vmatpush1.msra.mxu0 0.0
    %136 = vmatprep.subr.mxu0 0.0
    %137 = vmatpush1.msra.mxu0 0.0
    %138 = vmatprep.subr.mxu0 0.0
    %139 = vmatpush1.msra.mxu0 0.0
    %140 = vmatprep.subr.mxu0 0.0
    %141 = vmatpush1.msra.mxu0 0.0
    %142 = vmatprep.subr.mxu0 0.0
    %143 = vmatpush1.msra.mxu0 0.0
    %144 = vmatprep.subr.mxu0 0.0
    %145 = vmatpush1.msra.mxu0 %v102
    %146 = vmatprep.subr.mxu0 0.0
    %147 = vmatpush2.msra.mxu0 0.0
    %148 = vmatprep.subr.mxu0 0.0
    %149 = vmatpush2.msra.mxu0 0.0
    %150 = vmatprep.subr.mxu0 0.0
    %151 = vmatpush2.msra.mxu0 0.0
    %152 = vmatprep.subr.mxu0 0.0
    %153 = vmatpush2.msra.mxu0 0.0
    %154 = vmatprep.subr.mxu0 0.0
    %155 = vmatpush2.msra.mxu0 0.0
    %156 = vmatprep.subr.mxu0 0.0
    %157 = vmatpush2.msra.mxu0 0.0
    %158 = vmatprep.subr.mxu0 0.0
    %159 = vmatpush2.msra.mxu0 0.0
    %160 = vmatprep.subr.mxu0 0.0
    %161 = vmatpush2.msra.mxu0 0.0
    %162 = vmatprep.subr.mxu0 0.0
    %163 = vmatpush2.msra.mxu0 0.0
    %164 = vmatprep.subr.mxu0 0.0
    %165 = vmatpush2.msra.mxu0 0.0
    %166 = vmatprep.subr.mxu0 0.0
    %167 = vmatpush2.msra.mxu0 0.0
    %168 = vmatprep.subr.mxu0 0.0
    %169 = vmatpush2.msra.mxu0 0.0
    %170 = vmatprep.subr.mxu0 0.0
    %171 = vmatpush2.msra.mxu0 0.0
    %172 = vmatprep.subr.mxu0 0.0
    %173 = vmatpush2.msra.mxu0 0.0
    %174 = vmatprep.subr.mxu0 0.0
    %175 = vmatpush2.msra.mxu0 0.0
    %176 = vmatprep.subr.mxu0 0.0
    %177 = vmatpush2.msra.mxu0 0.0
    %178 = vmatprep.mubr.f32.mxu0 0.0
    %179 = vmatmul.mubr.f32.gmra.mxu0 %v112
    %v180 = vpop.f32.mrf.mxu0
    %v181 = vadd.f32 %v108, %v180
    %v182 = vpop.f32.mrf.mxu0
    %183 = vdwg.mxu0
    %v184 = vmax.f32 %v181, 0.0
    %v185 = vpack.c.bf16 %v184, %v184
    %v186 = vld [vmem:[#allocation6] sm:$0xf]
    %v187 = vld [vmem:[#allocation6 + $0x4] sm:$0xf]
    %v188 = vld [vmem:[#allocation6 + $0x8] sm:$0xf]
    %v189 = vld [vmem:[#allocation6 + $0xc] sm:$0xf]
    %v190 = vld [vmem:[#allocation6 + $0x10] sm:$0xf]
    %v191 = vld [vmem:[#allocation6 + $0x14] sm:$0xf]
    %v192 = vld [vmem:[#allocation6 + $0x18] sm:$0xf]
    %v193 = vld [vmem:[#allocation6 + $0x1c] sm:$0xf]
    %v194 = vld [vmem:[#allocation6 + $0x20] sm:$0xf]
    %v195 = vld [vmem:[#allocation6 + $0x24] sm:$0xf]
    %v196 = vld [vmem:[#allocation6 + $0x28] sm:$0xf]
    %v197 = vld [vmem:[#allocation6 + $0x2c] sm:$0xf]
    %v198 = vld [vmem:[#allocation6 + $0x30] sm:$0xf]
    %v199 = vld [vmem:[#allocation6 + $0x34] sm:$0xf]
    %v200 = vld [vmem:[#allocation6 + $0x38] sm:$0xf]
    %v201 = vld [vmem:[#allocation6 + $0x3c] sm:$0xf]
    %v202 = vld [vmem:[%s6] sm:$0x1]
    %v204 = vlaneseq
    %v205 = vshrl.u32 %v204, 7
    %v206 = vsub.s32 0, %v205
    %v207 = vrot.slane %v202, %v206
    %v225 = vunpack.c.l.b16 %v186
    %v226 = vunpack.c.l.b16 %v187
    %v227 = vunpack.c.l.b16 %v188
    %v228 = vunpack.c.l.b16 %v189
    %v229 = vunpack.c.l.b16 %v190
    %v230 = vunpack.c.l.b16 %v191
    %v231 = vunpack.c.l.b16 %v192
    %v232 = vunpack.c.l.b16 %v193
    %v233 = vunpack.c.l.b16 %v194
    %v234 = vunpack.c.l.b16 %v195
    %v235 = vunpack.c.l.b16 %v196
    %v236 = vunpack.c.l.b16 %v197
    %v237 = vunpack.c.l.b16 %v198
    %v238 = vunpack.c.l.b16 %v199
    %v239 = vunpack.c.l.b16 %v200
    %v240 = vunpack.c.l.b16 %v201
    %v241 = vpack.c.b16 %v226, %v225
    %v242 = vpack.c.b16 %v228, %v227
    %v243 = vpack.c.b16 %v230, %v229
    %v244 = vpack.c.b16 %v232, %v231
    %v245 = vpack.c.b16 %v234, %v233
    %v246 = vpack.c.b16 %v236, %v235
    %v247 = vpack.c.b16 %v238, %v237
    %v248 = vpack.c.b16 %v240, %v239
    %257 = vmatprep.subr.bf16.mxu0 0
    %258 = vmatpush1.bf16.msra.mxu0 %v248
    %259 = vmatprep.subr.bf16.mxu0 0
    %260 = vmatpush1.bf16.msra.mxu0 %v247
    %261 = vmatprep.subr.bf16.mxu0 0
    %262 = vmatpush1.bf16.msra.mxu0 %v246
    %263 = vmatprep.subr.bf16.mxu0 0
    %264 = vmatpush1.bf16.msra.mxu0 %v245
    %265 = vmatprep.subr.bf16.mxu0 0
    %266 = vmatpush1.bf16.msra.mxu0 %v244
    %267 = vmatprep.subr.bf16.mxu0 0
    %268 = vmatpush1.bf16.msra.mxu0 %v243
    %269 = vmatprep.subr.bf16.mxu0 0
    %270 = vmatpush1.bf16.msra.mxu0 %v242
    %271 = vmatprep.subr.bf16.mxu0 0
    %272 = vmatpush1.bf16.msra.mxu0 %v241
    %273 = vmatprep.subr.bf16.mxu0 0
    %274 = vmatpush2.bf16.msra.mxu0 0
    %275 = vmatprep.subr.bf16.mxu0 0
    %276 = vmatpush2.bf16.msra.mxu0 0
    %277 = vmatprep.subr.bf16.mxu0 0
    %278 = vmatpush2.bf16.msra.mxu0 0
    %279 = vmatprep.subr.bf16.mxu0 0
    %280 = vmatpush2.bf16.msra.mxu0 0
    %281 = vmatprep.subr.bf16.mxu0 0
    %282 = vmatpush2.bf16.msra.mxu0 0
    %283 = vmatprep.subr.bf16.mxu0 0
    %284 = vmatpush2.bf16.msra.mxu0 0
    %285 = vmatprep.subr.bf16.mxu0 0
    %286 = vmatpush2.bf16.msra.mxu0 0
    %287 = vmatprep.subr.bf16.mxu0 0
    %288 = vmatpush2.bf16.msra.mxu0 0
    %289 = vmatprep.mubr.bf16.mxu0 0
    %290 = vmatmul.mubr.bf16.gmra.mxu0 %v185
    %v291 = vpop.f32.mrf.mxu0
    %v292 = vadd.f32 %v207, %v291
    %v293 = vpop.f32.mrf.mxu0
    %v294 = vpop.f32.mrf.mxu0
    %v295 = vpop.f32.mrf.mxu0
    %296 = vdwg.mxu0
    %v297 = vmax.f32 %v292, 0.0
    %v298 = vpack.c.bf16 %v297, %v297
    %v299 = vld [vmem:[#allocation7] sm:$0xf]
    %v300 = vld [vmem:[#allocation7 + $0x4] sm:$0xf]
    %v301 = vld [vmem:[#allocation7 + $0x8] sm:$0xf]
    %v302 = vld [vmem:[#allocation7 + $0xc] sm:$0xf]
    %v303 = vld [vmem:[#allocation7 + $0x10] sm:$0xf]
    %v304 = vld [vmem:[#allocation7 + $0x14] sm:$0xf]
    %v305 = vld [vmem:[#allocation7 + $0x18] sm:$0xf]
    %v306 = vld [vmem:[#allocation7 + $0x1c] sm:$0xf]
    %v307 = vld [vmem:[#allocation7 + $0x20] sm:$0xf]
    %v308 = vld [vmem:[#allocation7 + $0x24] sm:$0xf]
    %v309 = vld [vmem:[#allocation7 + $0x28] sm:$0xf]
    %v310 = vld [vmem:[#allocation7 + $0x2c] sm:$0xf]
    %v311 = vld [vmem:[#allocation7 + $0x30] sm:$0xf]
    %v312 = vld [vmem:[#allocation7 + $0x34] sm:$0xf]
    %v313 = vld [vmem:[#allocation7 + $0x38] sm:$0xf]
    %v314 = vld [vmem:[#allocation7 + $0x3c] sm:$0xf]
    %v315 = vld [vmem:[%s8] sm:$0x1]
    %v317 = vlaneseq
    %v318 = vshrl.u32 %v317, 7
    %v319 = vsub.s32 0, %v318
    %v320 = vrot.slane %v315, %v319
    %v338 = vunpack.c.l.b16 %v299
    %v339 = vunpack.c.l.b16 %v300
    %v340 = vunpack.c.l.b16 %v301
    %v341 = vunpack.c.l.b16 %v302
    %v342 = vunpack.c.l.b16 %v303
    %v343 = vunpack.c.l.b16 %v304
    %v344 = vunpack.c.l.b16 %v305
    %v345 = vunpack.c.l.b16 %v306
    %v346 = vunpack.c.l.b16 %v307
    %v347 = vunpack.c.l.b16 %v308
    %v348 = vunpack.c.l.b16 %v309
    %v349 = vunpack.c.l.b16 %v310
    %v350 = vunpack.c.l.b16 %v311
    %v351 = vunpack.c.l.b16 %v312
    %v352 = vunpack.c.l.b16 %v313
    %v353 = vunpack.c.l.b16 %v314
    %v354 = vpack.c.b16 %v339, %v338
    %v355 = vpack.c.b16 %v341, %v340
    %v356 = vpack.c.b16 %v343, %v342
    %v357 = vpack.c.b16 %v345, %v344
    %v358 = vpack.c.b16 %v347, %v346
    %v359 = vpack.c.b16 %v349, %v348
    %v360 = vpack.c.b16 %v351, %v350
    %v361 = vpack.c.b16 %v353, %v352
    %370 = vmatprep.subr.bf16.mxu0 0
    %371 = vmatpush1.bf16.msra.mxu0 %v361
    %372 = vmatprep.subr.bf16.mxu0 0
    %373 = vmatpush1.bf16.msra.mxu0 %v360
    %374 = vmatprep.subr.bf16.mxu0 0
    %375 = vmatpush1.bf16.msra.mxu0 %v359
    %376 = vmatprep.subr.bf16.mxu0 0
    %377 = vmatpush1.bf16.msra.mxu0 %v358
    %378 = vmatprep.subr.bf16.mxu0 0
    %379 = vmatpush1.bf16.msra.mxu0 %v357
    %380 = vmatprep.subr.bf16.mxu0 0
    %381 = vmatpush1.bf16.msra.mxu0 %v356
    %382 = vmatprep.subr.bf16.mxu0 0
    %383 = vmatpush1.bf16.msra.mxu0 %v355
    %384 = vmatprep.subr.bf16.mxu0 0
    %385 = vmatpush1.bf16.msra.mxu0 %v354
    %386 = vmatprep.subr.bf16.mxu0 0
    %387 = vmatpush2.bf16.msra.mxu0 0
    %388 = vmatprep.subr.bf16.mxu0 0
    %389 = vmatpush2.bf16.msra.mxu0 0
    %390 = vmatprep.subr.bf16.mxu0 0
    %391 = vmatpush2.bf16.msra.mxu0 0
    %392 = vmatprep.subr.bf16.mxu0 0
    %393 = vmatpush2.bf16.msra.mxu0 0
    %394 = vmatprep.subr.bf16.mxu0 0
    %395 = vmatpush2.bf16.msra.mxu0 0
    %396 = vmatprep.subr.bf16.mxu0 0
    %397 = vmatpush2.bf16.msra.mxu0 0
    %398 = vmatprep.subr.bf16.mxu0 0
    %399 = vmatpush2.bf16.msra.mxu0 0
    %400 = vmatprep.subr.bf16.mxu0 0
    %401 = vmatpush2.bf16.msra.mxu0 0
    %402 = vmatprep.mubr.bf16.mxu0 0
    %403 = vmatmul.mubr.bf16.gmra.mxu0 %v298
    %v404 = vpop.f32.mrf.mxu0
    %v405 = vadd.f32 %v320, %v404
    %v406 = vpop.f32.mrf.mxu0
    %v407 = vpop.f32.mrf.mxu0
    %v408 = vpop.f32.mrf.mxu0
    %409 = vdwg.mxu0
    %410 = vmax.xlane.f32.xlu0 %v405
    %v411 = vpop.xlane.xlu0 %410
    %v412 = vsub.f32 %v405, %v411
    %v413 = vmul.f32 %v412, 1.442695
    %v414 = vpow.pop %v413
    %415 = vadd.xlane.f32.xlu0 %v414
    %v416 = vpop.xlane.xlu0 %415
    %v417 = vrcp.pop %v416
    %v418 = vmul.f32 %v414, %v417
    %vm419 = vcmask 31744
    %420 = vst.msk [vmem:[%s9] sm:$0xff] %vm419, %v418
    // Predicated region
    $region54: #{tpu_custom_call.1} parent=1 // pred_check
      _
    $region55: #{tpu_custom_call.1} parent=1 // pred_check_branch
      %422 = sbr.rel (0) target = $region57
    $region56: #{tpu_custom_call.1} parent=1 // pred_region
      _
    $region57: #{tpu_custom_call.1} parent=1 // pred_fallthru
      _
    // Predicated region
    $region58: #{tpu_custom_call.1} parent=1 // pred_check
      _
    $region59: #{tpu_custom_call.1} parent=1 // pred_check_branch
      %424 = sbr.rel (0) target = $region61
    $region60: #{tpu_custom_call.1} parent=1 // pred_region
      _
    $region61: #{tpu_custom_call.1} parent=1 // pred_fallthru
      _
    %425 = vsyncpa [#allocation3], 1
    %426 = vsyncpa [#allocation5], 1
    %427 = vsyncpa [#allocation8], 1

</llo_original>
